<compile_context>
chip_gen: v6e
topology: v6e:2x2x1
jax: 0.10.0
libtpu: 0.0.40
codegen_flags: <defaults>
</compile_context>

<pallas_src>
import functools

import jax
import jax.numpy as jnp
from jax.experimental import pallas as pl
from jax.experimental.pallas import tpu as pltpu


def _se1d_kernel(x_ref, w1_ref, w2_ref, o_ref, *, inv_l, spatial_axis):
    # x_ref:  (bt, C, L) if spatial_axis == 2, (bt, L, C) if spatial_axis == 1
    # w1_ref: (C//r, C)   PyTorch nn.Linear layout (out_features, in_features)
    # w2_ref: (C, C//r)

    # "Squeeze": AdaptiveAvgPool1d(1) == mean over the spatial axis.  Accumulate in
    # f32 via the reduction dtype -- no full-tile f32 materialization.
    y = jnp.sum(x_ref[...], axis=spatial_axis, dtype=jnp.float32) * inv_l   # (bt, C)

    # "Excite": Linear -> ReLU -> Linear -> Sigmoid (no biases).  Tiny matmuls,
    # latency-only; contract on in_features (dim 1 of both operands) so the weights
    # need no host-side transpose.
    w1 = w1_ref[...].astype(jnp.float32)
    w2 = w2_ref[...].astype(jnp.float32)
    h = jax.lax.dot_general(y, w1, (((1,), (1,)), ((), ())),
                            preferred_element_type=jnp.float32)
    h = jnp.maximum(h, 0.0)                                                 # (bt, C//r)
    s = jax.nn.sigmoid(
        jax.lax.dot_general(h, w2, (((1,), (1,)), ((), ())),
                            preferred_element_type=jnp.float32))            # (bt, C)

    # Scale: re-read x from VMEM (vld is cheap; shortens the live range of the big
    # tile across the serial excite chain) and multiply in the input dtype.
    s = jnp.expand_dims(s.astype(o_ref.dtype), spatial_axis)
    o_ref[...] = x_ref[...] * s


def _vmem_capacity_bytes(default_bytes=64 * 1024 * 1024):
    """Physical VMEM per core; conservative 64 MiB (v7x) fallback if query fails."""
    try:
        cap = getattr(pltpu.get_tpu_info(), "vmem_capacity_bytes", None)
        if cap:
            return int(cap)
    except Exception:
        pass
    return default_bytes


def _num_tensorcores():
    try:
        return max(1, int(getattr(jax.devices()[0], "num_cores", 1)))
    except Exception:
        return 1


def _pick_batch_block(B, per_batch_bytes, tile_budget_bytes, num_cores):
    """Largest bt whose double-buffered in+out tiles fit the tile budget.

    Only on multi-TensorCore parts do we additionally keep >= num_cores grid steps so
    every core gets work; on single-TC v5e/v6e that cap would just shrink tiles.
    """
    bytes_per_b = 4 * per_batch_bytes   # 2x double-buffer x (input + output) VMEM tiles
    bt = max(1, tile_budget_bytes // bytes_per_b)
    if num_cores > 1 and B > 1:
        bt = min(bt, pl.cdiv(B, num_cores))
    return int(min(bt, B))


def se_layer_1d(x, w1, w2, *, channels_last=False,
                tile_budget_bytes=None, vmem_limit_bytes=None, alias_input=True):
    """SELayer1D forward.

    x:  (B, C, L) in PyTorch NCL layout, or (B, L, C) if channels_last=True.
    w1: (C//r, C), w2: (C, C//r) -- PyTorch nn.Linear weight layout, no biases.
    """
    if channels_last:
        B, L, C = x.shape
        spatial_axis = 1
    else:
        B, C, L = x.shape
        spatial_axis = 2
    hidden = w1.shape[0]
    assert w1.shape == (hidden, C) and w2.shape == (C, hidden)

    # Generation-aware VMEM budgets:
    #   v5e/v6e (128 MiB): limit 96 MiB, tile budget 32 MiB.
    #   v7x     (64 MiB):  limit 48 MiB, tile budget 16 MiB.
    vmem_cap = _vmem_capacity_bytes()
    if vmem_limit_bytes is None:
        vmem_limit_bytes = min((3 * vmem_cap) // 4, 96 * 1024 * 1024)
    if tile_budget_bytes is None:
        tile_budget_bytes = vmem_cap // 4

    per_b_bytes = C * L * x.dtype.itemsize
    bt = _pick_batch_block(B, per_b_bytes, tile_budget_bytes, _num_tensorcores())
    grid = (pl.cdiv(B, bt),)
    # NOTE: when B % bt != 0 the last step computes on padded rows; batch rows are
    # independent and out-of-bounds writes are dropped, so this is safe.

    block = (bt, L, C) if channels_last else (bt, C, L)
    kernel = functools.partial(_se1d_kernel, inv_l=1.0 / L, spatial_axis=spatial_axis)

    return pl.pallas_call(
        kernel,
        out_shape=jax.ShapeDtypeStruct(x.shape, x.dtype),
        grid_spec=pl.GridSpec(
            grid=grid,
            in_specs=[
                pl.BlockSpec(block, lambda i: (i, 0, 0)),
                # Tiny grid-invariant weights: full-extent blocks.
                pl.BlockSpec((hidden, C), lambda i: (0, 0)),
                pl.BlockSpec((C, hidden), lambda i: (0, 0)),
            ],
            out_specs=pl.BlockSpec(block, lambda i: (i, 0, 0)),
        ),
        compiler_params=pltpu.CompilerParams(
            dimension_semantics=("parallel",),
            vmem_limit_bytes=int(vmem_limit_bytes),
        ),
        # Pure streaming scale: x and out share shape/dtype/block -> alias so donated
        # callers avoid an extra HBM buffer (XLA copies if the input is not donated).
        input_output_aliases={0: 0} if alias_input else {},
    )(x, w1, w2)


def se_layer_1d_ref(x, w1, w2):
    # Pure-JAX reference mirroring the PyTorch forward (NCL layout).
    y = jnp.mean(x, axis=-1)                       # (B, C)
    h = jnp.maximum(y @ w1.T, 0.0)                 # (B, C//r)
    s = jax.nn.sigmoid(h @ w2.T)                   # (B, C)
    return x * s[:, :, None]


if __name__ == "__main__":
    B, C, L, reduction = 2, 32, 16, 8
    hidden = C // reduction

    key = jax.random.PRNGKey(0)
    kx, k1, k2 = jax.random.split(key, 3)
    x = jax.random.normal(kx, (B, C, L), dtype=jnp.float32)
    # nn.Linear weights: (out_features, in_features), deterministic init.
    w1 = jax.random.normal(k1, (hidden, C), dtype=jnp.float32) * 0.1
    w2 = jax.random.normal(k2, (C, hidden), dtype=jnp.float32) * 0.1

    ref = se_layer_1d_ref(x, w1, w2)
    xt = jnp.transpose(x, (0, 2, 1))               # channels-last copy, made up front

    # Primary NCL path (matches the PyTorch module's layout).
    out = jax.block_until_ready(se_layer_1d(x, w1, w2))
    assert out.shape == (B, C, L)
    assert jnp.allclose(out, ref, atol=1e-5, rtol=1e-5)

    # Channels-last path (lane-dense stores when C % 128 == 0 in production shapes).
    out_t = jax.block_until_ready(se_layer_1d(xt, w1, w2, channels_last=True))
    assert out_t.shape == (B, L, C)
    assert jnp.allclose(out_t, jnp.transpose(ref, (0, 2, 1)), atol=1e-5, rtol=1e-5)

    print("KERNEL_OK")
</pallas_src>

<mosaic_0001>
module attributes {stable_mosaic.version = 11 : i64} {
  func.func @_se1d_kernel(%arg0: i32, %arg1: memref<2x32x16xf32, #tpu.memory_space<vmem>>, %arg2: memref<4x32xf32, #tpu.memory_space<vmem>>, %arg3: memref<32x4xf32, #tpu.memory_space<vmem>>, %arg4: memref<2x32x16xf32, #tpu.memory_space<vmem>>) attributes {dimension_semantics = [#tpu.dimension_semantics<parallel>], iteration_bounds = array<i64: 1>, scalar_prefetch = 0 : i64, scratch_operands = 0 : i64, tpu.core_type = #tpu.core_type<tc>, window_params = [{transform_indices = @transform_0, window_bounds = array<i64: 2, 32, 16>}, {pipeline_mode = #tpu.pipeline_mode<synchronous>, transform_indices = @transform_1, window_bounds = array<i64: 4, 32>}, {pipeline_mode = #tpu.pipeline_mode<synchronous>, transform_indices = @transform_2, window_bounds = array<i64: 32, 4>}, {transform_indices = @transform_3, window_bounds = array<i64: 2, 32, 16>}]} {
    %c0 = arith.constant 0 : index
    %c0_0 = arith.constant 0 : index
    %c0_1 = arith.constant 0 : index
    %0 = vector.load %arg1[%c0, %c0_0, %c0_1] : memref<2x32x16xf32, #tpu.memory_space<vmem>>, vector<2x32x16xf32>
    %cst = arith.constant dense<0.000000e+00> : vector<2x32xf32>
    %1 = vector.multi_reduction <add>, %0, %cst [2] : vector<2x32x16xf32> to vector<2x32xf32>
    %cst_2 = arith.constant 6.250000e-02 : f32
    %2 = vector.broadcast %cst_2 : f32 to vector<2x32xf32>
    %3 = arith.mulf %1, %2 : vector<2x32xf32>
    %c0_3 = arith.constant 0 : index
    %c0_4 = arith.constant 0 : index
    %4 = vector.load %arg2[%c0_3, %c0_4] : memref<4x32xf32, #tpu.memory_space<vmem>>, vector<4x32xf32>
    %c0_5 = arith.constant 0 : index
    %c0_6 = arith.constant 0 : index
    %5 = vector.load %arg3[%c0_5, %c0_6] : memref<32x4xf32, #tpu.memory_space<vmem>>, vector<32x4xf32>
    %cst_7 = arith.constant dense<0.000000e+00> : vector<2x4xf32>
    %6 = tpu.matmul %3, %4, %cst_7 {dimension_numbers = #tpu.dot_dimension_numbers<[1], [1], [0], [0], [0, 0, 1, 0], [], []>} : vector<2x32xf32>, vector<4x32xf32>, vector<2x4xf32> -> vector<2x4xf32>
    %cst_8 = arith.constant 0.000000e+00 : f32
    %7 = vector.broadcast %cst_8 : f32 to vector<2x4xf32>
    %8 = arith.maximumf %6, %7 : vector<2x4xf32>
    %cst_9 = arith.constant dense<0.000000e+00> : vector<2x32xf32>
    %9 = tpu.matmul %8, %5, %cst_9 {dimension_numbers = #tpu.dot_dimension_numbers<[1], [1], [0], [0], [0, 0, 1, 0], [], []>} : vector<2x4xf32>, vector<32x4xf32>, vector<2x32xf32> -> vector<2x32xf32>
    %10 = arith.negf %9 : vector<2x32xf32>
    %11 = math.exp %10 : vector<2x32xf32>
    %cst_10 = arith.constant 1.000000e+00 : f32
    %12 = vector.broadcast %cst_10 : f32 to vector<2x32xf32>
    %13 = arith.addf %12, %11 : vector<2x32xf32>
    %14 = arith.divf %12, %13 : vector<2x32xf32>
    %15 = vector.shape_cast %14 : vector<2x32xf32> to vector<2x32x1xf32>
    %c0_11 = arith.constant 0 : index
    %c0_12 = arith.constant 0 : index
    %c0_13 = arith.constant 0 : index
    %16 = vector.load %arg1[%c0_11, %c0_12, %c0_13] : memref<2x32x16xf32, #tpu.memory_space<vmem>>, vector<2x32x16xf32>
    %17 = vector.broadcast %15 : vector<2x32x1xf32> to vector<2x32x16xf32>
    %18 = arith.mulf %16, %17 : vector<2x32x16xf32>
    %c0_14 = arith.constant 0 : index
    %c0_15 = arith.constant 0 : index
    %c0_16 = arith.constant 0 : index
    %19 = vector.load %arg4[%c0_14, %c0_15, %c0_16] : memref<2x32x16xf32, #tpu.memory_space<vmem>>, vector<2x32x16xf32>
    tpu.vector_store %arg4[%c0_14, %c0_15, %c0_16], %18 {strides = array<i32>} : memref<2x32x16xf32, #tpu.memory_space<vmem>>, vector<2x32x16xf32>,
    return
  }
  func.func @transform_0(%arg0: i32) -> (i32, i32, i32) {
    %c0_i32 = arith.constant 0 : i32
    %c0_i32_0 = arith.constant 0 : i32
    %c0_i32_1 = arith.constant 0 : i32
    return %arg0, %c0_i32, %c0_i32_0 : i32, i32, i32
  }
  func.func @transform_1(%arg0: i32) -> (i32, i32) {
    %c0_i32 = arith.constant 0 : i32
    %c0_i32_0 = arith.constant 0 : i32
    %c0_i32_1 = arith.constant 0 : i32
    return %c0_i32, %c0_i32_0 : i32, i32
  }
  func.func @transform_2(%arg0: i32) -> (i32, i32) {
    %c0_i32 = arith.constant 0 : i32
    %c0_i32_0 = arith.constant 0 : i32
    %c0_i32_1 = arith.constant 0 : i32
    return %c0_i32, %c0_i32_0 : i32, i32
  }
  func.func @transform_3(%arg0: i32) -> (i32, i32, i32) {
    %c0_i32 = arith.constant 0 : i32
    %c0_i32_0 = arith.constant 0 : i32
    %c0_i32_1 = arith.constant 0 : i32
    return %arg0, %c0_i32, %c0_i32_0 : i32, i32, i32
  }
}

</mosaic_0001>

<llo_original>
// kernel: tpu_custom_call.1
$region0: #{tpu_custom_call.1}
  #allocation0 [shape = 'u32[]', space=smem, size = 0x4, offset = 0x4, fixed_abs, tag = 'smem constant byte address 0x4 - core index']
  #allocation1 [shape = 'u32[144,128]{1,0:T(1,128)}', space=vmem, size = 0x12000, scoped, tag = 'internal scratch']
  %s0 = inlined_call_operand.vmem [shape: f32[2,32,16], index: 0, kind: input, shape index: {}, may-alias: {0,3}]
  %s1 = inlined_call_operand.vmem [shape: f32[4,32], index: 1, kind: input, shape index: {}]
  %s2 = inlined_call_operand.vmem [shape: f32[32,4], index: 2, kind: input, shape index: {}]
  %s3 = inlined_call_operand.vmem [shape: f32[2,32,16], index: 3, kind: output, shape index: {}, may-alias: {0,3}]
  %s4 = sld [smem:[#allocation0]]
  $region22: #{tpu_custom_call.1} parent=0
    _
  %s6 = ssub.s32 1, %s4
  %s7 = scalar_select 0, %s6, %s4
  // Predicated region
  $region2: #{tpu_custom_call.1} parent=0 // pred_check
    _
  $region3: #{tpu_custom_call.1} parent=0 // pred_check_branch
    %9 = sbr.rel (0) target = $region5
  $region4: #{tpu_custom_call.1} parent=0 // pred_region
    _
  $region5: #{tpu_custom_call.1} parent=0 // pred_fallthru
    _
  // Predicated region
  $region6: #{tpu_custom_call.1} parent=0 // pred_check
    _
  $region7: #{tpu_custom_call.1} parent=0 // pred_check_branch
    %11 = sbr.rel (0) target = $region9
  $region8: #{tpu_custom_call.1} parent=0 // pred_region
    _
  $region9: #{tpu_custom_call.1} parent=0 // pred_fallthru
    _
  // Predicated region
  $region10: #{tpu_custom_call.1} parent=0 // pred_check
    _
  $region11: #{tpu_custom_call.1} parent=0 // pred_check_branch
    %13 = sbr.rel (0) target = $region13
  $region12: #{tpu_custom_call.1} parent=0 // pred_region
    _
  $region13: #{tpu_custom_call.1} parent=0 // pred_fallthru
    _
  %v14 = vld [vmem:[%s0] sm:$0xff]
  %v15 = vld [vmem:[%s0 + $0x8] sm:$0xff]
  %v16 = vld [vmem:[%s0 + $0x10] sm:$0xff]
  %v17 = vld [vmem:[%s0 + $0x18] sm:$0xff]
  %v18 = vld [vmem:[%s0 + $0x20] sm:$0xff]
  %v19 = vld [vmem:[%s0 + $0x28] sm:$0xff]
  %v20 = vld [vmem:[%s0 + $0x30] sm:$0xff]
  %v21 = vld [vmem:[%s0 + $0x38] sm:$0xff]
  %vm22 = vcmask 130048
  %v23 = vsel %vm22, %v14, 0.0
  %24 = vadd.xlane.f32.xlu0 %v23
  %v25 = vpop.xlane.xlu0 %24
  %v26 = vsel %vm22, %v15, 0.0
  %27 = vadd.xlane.f32.xlu0 %v26
  %v28 = vpop.xlane.xlu0 %27
  %v29 = vsel %vm22, %v16, 0.0
  %30 = vadd.xlane.f32.xlu0 %v29
  %v31 = vpop.xlane.xlu0 %30
  %v32 = vsel %vm22, %v17, 0.0
  %33 = vadd.xlane.f32.xlu0 %v32
  %v34 = vpop.xlane.xlu0 %33
  %v35 = vsel %vm22, %v18, 0.0
  %36 = vadd.xlane.f32.xlu0 %v35
  %v37 = vpop.xlane.xlu0 %36
  %v38 = vsel %vm22, %v19, 0.0
  %39 = vadd.xlane.f32.xlu0 %v38
  %v40 = vpop.xlane.xlu0 %39
  %v41 = vsel %vm22, %v20, 0.0
  %42 = vadd.xlane.f32.xlu0 %v41
  %v43 = vpop.xlane.xlu0 %42
  %v44 = vsel %vm22, %v21, 0.0
  %45 = vadd.xlane.f32.xlu0 %v44
  %v46 = vpop.xlane.xlu0 %45
  %v47 = vmul.f32 %v25, 0.0625
  %v48 = vmul.f32 %v28, 0.0625
  %v49 = vmul.f32 %v31, 0.0625
  %v50 = vmul.f32 %v34, 0.0625
  %v51 = vmul.f32 %v37, 0.0625
  %v52 = vmul.f32 %v40, 0.0625
  %v53 = vmul.f32 %v43, 0.0625
  %v54 = vmul.f32 %v46, 0.0625
  %v55 = vld [vmem:[%s1] sm:$0xf]
  %v56 = vld [vmem:[%s2] sm:$0xff]
  %v57 = vld [vmem:[%s2 + $0x8] sm:$0xff]
  %v58 = vld [vmem:[%s2 + $0x10] sm:$0xff]
  %v59 = vld [vmem:[%s2 + $0x18] sm:$0xff]
  %v68 = vlaneseq
  %v69 = vand.u32 %v68, 127
  %v70 = vlaneseq
  %v71 = vshrl.u32 %v70, 7
  %v72 = vsub.s32 %v69, %v71
  %v73 = vrot.slane %v47, %v72
  %v74 = vadd.s32 %v69, 4294967288
  %v75 = vlaneseq
  %v76 = vshrl.u32 %v75, 7
  %v77 = vsub.s32 %v74, %v76
  %v78 = vrot.slane %v48, %v77
  %vm79 = vcmask 130112
  %v80 = vsel %vm79, %v78, %v73
  %v81 = vadd.s32 %v69, 4294967280
  %v82 = vlaneseq
  %v83 = vshrl.u32 %v82, 7
  %v84 = vsub.s32 %v81, %v83
  %v85 = vrot.slane %v49, %v84
  %vm86 = vcmask 195712
  %v87 = vsel %vm86, %v85, %v80
  %v88 = vadd.s32 %v69, 4294967272
  %v89 = vlaneseq
  %v90 = vshrl.u32 %v89, 7
  %v91 = vsub.s32 %v88, %v90
  %v92 = vrot.slane %v50, %v91
  %vm93 = vcmask 261312
  %v94 = vsel %vm93, %v92, %v87
  %v95 = vlaneseq
  %v96 = vshrl.u32 %v95, 7
  %v97 = vsub.s32 %v69, %v96
  %v98 = vrot.slane %v51, %v97
  %v99 = vlaneseq
  %v100 = vshrl.u32 %v99, 7
  %v101 = vsub.s32 %v74, %v100
  %v102 = vrot.slane %v52, %v101
  %v103 = vsel %vm79, %v102, %v98
  %v104 = vlaneseq
  %v105 = vshrl.u32 %v104, 7
  %v106 = vsub.s32 %v81, %v105
  %v107 = vrot.slane %v53, %v106
  %v108 = vsel %vm86, %v107, %v103
  %v109 = vlaneseq
  %v110 = vshrl.u32 %v109, 7
  %v111 = vsub.s32 %v88, %v110
  %v112 = vrot.slane %v54, %v111
  %v113 = vsel %vm93, %v112, %v108
  %vm114 = vcmask 1041409
  %v115 = vsel %vm114, %v113, %v94
  %vm116 = vcmask 261120
  %v117 = vsel %vm116, %v115, 0
  %v120 = vsel %vm116, %v55, 0
  %122 = vmatprep.subr.mxu0 0.0
  %123 = vmatpush1.xpose.msra.mxu0 0.0
  %124 = vmatprep.subr.mxu0 0.0
  %125 = vmatpush1.xpose.msra.mxu0 0.0
  %126 = vmatprep.subr.mxu0 0.0
  %127 = vmatpush1.xpose.msra.mxu0 0.0
  %128 = vmatprep.subr.mxu0 0.0
  %129 = vmatpush1.xpose.msra.mxu0 0.0
  %130 = vmatprep.subr.mxu0 0.0
  %131 = vmatpush1.xpose.msra.mxu0 0.0
  %132 = vmatprep.subr.mxu0 0.0
  %133 = vmatpush1.xpose.msra.mxu0 0.0
  %134 = vmatprep.subr.mxu0 0.0
  %135 = vmatpush1.xpose.msra.mxu0 0.0
  %136 = vmatprep.subr.mxu0 0.0
  %137 = vmatpush1.xpose.msra.mxu0 0.0
  %138 = vmatprep.subr.mxu0 0.0
  %139 = vmatpush1.xpose.msra.mxu0 0.0
  %140 = vmatprep.subr.mxu0 0.0
  %141 = vmatpush1.xpose.msra.mxu0 0.0
  %142 = vmatprep.subr.mxu0 0.0
  %143 = vmatpush1.xpose.msra.mxu0 0.0
  %144 = vmatprep.subr.mxu0 0.0
  %145 = vmatpush1.xpose.msra.mxu0 0.0
  %146 = vmatprep.subr.mxu0 0.0
  %147 = vmatpush1.xpose.msra.mxu0 0.0
  %148 = vmatprep.subr.mxu0 0.0
  %149 = vmatpush1.xpose.msra.mxu0 0.0
  %150 = vmatprep.subr.mxu0 0.0
  %151 = vmatpush1.xpose.msra.mxu0 0.0
  %152 = vmatprep.subr.mxu0 0.0
  %153 = vmatpush1.xpose.msra.mxu0 %v120
  %154 = vmatprep.subr.mxu0 0.0
  %155 = vmatpush2.xpose.msra.mxu0 0.0
  %156 = vmatprep.subr.mxu0 0.0
  %157 = vmatpush2.xpose.msra.mxu0 0.0
  %158 = vmatprep.subr.mxu0 0.0
  %159 = vmatpush2.xpose.msra.mxu0 0.0
  %160 = vmatprep.subr.mxu0 0.0
  %161 = vmatpush2.xpose.msra.mxu0 0.0
  %162 = vmatprep.subr.mxu0 0.0
  %163 = vmatpush2.xpose.msra.mxu0 0.0
  %164 = vmatprep.subr.mxu0 0.0
  %165 = vmatpush2.xpose.msra.mxu0 0.0
  %166 = vmatprep.subr.mxu0 0.0
  %167 = vmatpush2.xpose.msra.mxu0 0.0
  %168 = vmatprep.subr.mxu0 0.0
  %169 = vmatpush2.xpose.msra.mxu0 0.0
  %170 = vmatprep.subr.mxu0 0.0
  %171 = vmatpush2.xpose.msra.mxu0 0.0
  %172 = vmatprep.subr.mxu0 0.0
  %173 = vmatpush2.xpose.msra.mxu0 0.0
  %174 = vmatprep.subr.mxu0 0.0
  %175 = vmatpush2.xpose.msra.mxu0 0.0
  %176 = vmatprep.subr.mxu0 0.0
  %177 = vmatpush2.xpose.msra.mxu0 0.0
  %178 = vmatprep.subr.mxu0 0.0
  %179 = vmatpush2.xpose.msra.mxu0 0.0
  %180 = vmatprep.subr.mxu0 0.0
  %181 = vmatpush2.xpose.msra.mxu0 0.0
  %182 = vmatprep.subr.mxu0 0.0
  %183 = vmatpush2.xpose.msra.mxu0 0.0
  %184 = vmatprep.subr.mxu0 0.0
  %185 = vmatpush2.xpose.msra.mxu0 0.0
  %186 = vmatprep.mubr.f32.mxu0 0.0
  %187 = vmatmul.mubr.f32.gmra.mxu0 %v117
  %v188 = vpop.f32.mrf.mxu0
  %v189 = vadd.f32 0.0, %v188
  %v190 = vpop.f32.mrf.mxu0
  %191 = vdwg.mxu0
  %v192 = vmax.f32 %v189, 0.0
  %vm193 = vcmask 31744
  %v195 = vsel %vm193, %v192, 0
  %v198 = vsel %vm193, %v56, 0
  %v201 = vsel %vm193, %v57, 0
  %v204 = vsel %vm193, %v58, 0
  %v207 = vsel %vm193, %v59, 0
  %209 = vmatprep.subr.mxu0 0.0
  %210 = vmatpush1.xpose.msra.mxu0 0.0
  %211 = vmatprep.subr.mxu0 0.0
  %212 = vmatpush1.xpose.msra.mxu0 0.0
  %213 = vmatprep.subr.mxu0 0.0
  %214 = vmatpush1.xpose.msra.mxu0 0.0
  %215 = vmatprep.subr.mxu0 0.0
  %216 = vmatpush1.xpose.msra.mxu0 0.0
  %217 = vmatprep.subr.mxu0 0.0
  %218 = vmatpush1.xpose.msra.mxu0 0.0
  %219 = vmatprep.subr.mxu0 0.0
  %220 = vmatpush1.xpose.msra.mxu0 0.0
  %221 = vmatprep.subr.mxu0 0.0
  %222 = vmatpush1.xpose.msra.mxu0 0.0
  %223 = vmatprep.subr.mxu0 0.0
  %224 = vmatpush1.xpose.msra.mxu0 0.0
  %225 = vmatprep.subr.mxu0 0.0
  %226 = vmatpush1.xpose.msra.mxu0 0.0
  %227 = vmatprep.subr.mxu0 0.0
  %228 = vmatpush1.xpose.msra.mxu0 0.0
  %229 = vmatprep.subr.mxu0 0.0
  %230 = vmatpush1.xpose.msra.mxu0 0.0
  %231 = vmatprep.subr.mxu0 0.0
  %232 = vmatpush1.xpose.msra.mxu0 0.0
  %233 = vmatprep.subr.mxu0 0.0
  %234 = vmatpush1.xpose.msra.mxu0 %v207
  %235 = vmatprep.subr.mxu0 0.0
  %236 = vmatpush1.xpose.msra.mxu0 %v204
  %237 = vmatprep.subr.mxu0 0.0
  %238 = vmatpush1.xpose.msra.mxu0 %v201
  %239 = vmatprep.subr.mxu0 0.0
  %240 = vmatpush1.xpose.msra.mxu0 %v198
  %241 = vmatprep.subr.mxu0 0.0
  %242 = vmatpush2.xpose.msra.mxu0 0.0
  %243 = vmatprep.subr.mxu0 0.0
  %244 = vmatpush2.xpose.msra.mxu0 0.0
  %245 = vmatprep.subr.mxu0 0.0
  %246 = vmatpush2.xpose.msra.mxu0 0.0
  %247 = vmatprep.subr.mxu0 0.0
  %248 = vmatpush2.xpose.msra.mxu0 0.0
  %249 = vmatprep.subr.mxu0 0.0
  %250 = vmatpush2.xpose.msra.mxu0 0.0
  %251 = vmatprep.subr.mxu0 0.0
  %252 = vmatpush2.xpose.msra.mxu0 0.0
  %253 = vmatprep.subr.mxu0 0.0
  %254 = vmatpush2.xpose.msra.mxu0 0.0
  %255 = vmatprep.subr.mxu0 0.0
  %256 = vmatpush2.xpose.msra.mxu0 0.0
  %257 = vmatprep.subr.mxu0 0.0
  %258 = vmatpush2.xpose.msra.mxu0 0.0
  %259 = vmatprep.subr.mxu0 0.0
  %260 = vmatpush2.xpose.msra.mxu0 0.0
  %261 = vmatprep.subr.mxu0 0.0
  %262 = vmatpush2.xpose.msra.mxu0 0.0
  %263 = vmatprep.subr.mxu0 0.0
  %264 = vmatpush2.xpose.msra.mxu0 0.0
  %265 = vmatprep.subr.mxu0 0.0
  %266 = vmatpush2.xpose.msra.mxu0 0.0
  %267 = vmatprep.subr.mxu0 0.0
  %268 = vmatpush2.xpose.msra.mxu0 0.0
  %269 = vmatprep.subr.mxu0 0.0
  %270 = vmatpush2.xpose.msra.mxu0 0.0
  %271 = vmatprep.subr.mxu0 0.0
  %272 = vmatpush2.xpose.msra.mxu0 0.0
  %273 = vmatprep.mubr.f32.mxu0 0.0
  %274 = vmatmul.mubr.f32.gmra.mxu0 %v195
  %v275 = vpop.f32.mrf.mxu0
  %v276 = vadd.f32 0.0, %v275
  %v277 = vpop.f32.mrf.mxu0
  %278 = vdwg.mxu0
  %v279 = vxor.u32 %v276, 2147483648
  %v280 = vmul.f32 %v279, 1.442695
  %v281 = vpow.pop %v280
  %v282 = vadd.f32 %v281, 1.0
  %v283 = vrcp.pop %v282
  %v284 = vmul.f32 1.0, %v283
  %v285 = vlaneseq
  %v286 = vshrl.u32 %v285, 7
  %v287 = vsub.s32 0, %v286
  %v288 = vrot.slane %v284, %v287
  %290 = vbcast.lane.b32.xlu0 %v288, 256
  %v291 = vpop.permute.xlu0 %290
  %s293 = sor.u32 256, 8
  %294 = vbcast.lane.b32.xlu0 %v288, %s293
  %v295 = vpop.permute.xlu0 %294
  %s297 = sor.u32 256, 16
  %298 = vbcast.lane.b32.xlu0 %v288, %s297
  %v299 = vpop.permute.xlu0 %298
  %s301 = sor.u32 256, 24
  %302 = vbcast.lane.b32.xlu0 %v288, %s301
  %v303 = vpop.permute.xlu0 %302
  %v304 = vlaneseq
  %v305 = vshrl.u32 %v304, 7
  %v306 = vsub.s32 1, %v305
  %v307 = vrot.slane %v284, %v306
  %309 = vbcast.lane.b32.xlu0 %v307, 256
  %v310 = vpop.permute.xlu0 %309
  %s312 = sor.u32 256, 8
  %313 = vbcast.lane.b32.xlu0 %v307, %s312
  %v314 = vpop.permute.xlu0 %313
  %s316 = sor.u32 256, 16
  %317 = vbcast.lane.b32.xlu0 %v307, %s316
  %v318 = vpop.permute.xlu0 %317
  %s320 = sor.u32 256, 24
  %321 = vbcast.lane.b32.xlu0 %v307, %s320
  %v322 = vpop.permute.xlu0 %321
  %v323 = vmul.f32 %v14, %v291
  %v324 = vmul.f32 %v15, %v295
  %v325 = vmul.f32 %v16, %v299
  %v326 = vmul.f32 %v17, %v303
  %v327 = vmul.f32 %v18, %v310
  %v328 = vmul.f32 %v19, %v314
  %v329 = vmul.f32 %v20, %v318
  %v330 = vmul.f32 %v21, %v322
  %331 = vst.msk [vmem:[%s3] sm:$0xff] %vm22, %v323
  %332 = vst.msk [vmem:[%s3 + $0x8] sm:$0xff] %vm22, %v324
  %333 = vst.msk [vmem:[%s3 + $0x10] sm:$0xff] %vm22, %v325
  %334 = vst.msk [vmem:[%s3 + $0x18] sm:$0xff] %vm22, %v326
  %335 = vst.msk [vmem:[%s3 + $0x20] sm:$0xff] %vm22, %v327
  %336 = vst.msk [vmem:[%s3 + $0x28] sm:$0xff] %vm22, %v328
  %337 = vst.msk [vmem:[%s3 + $0x30] sm:$0xff] %vm22, %v329
  %338 = vst.msk [vmem:[%s3 + $0x38] sm:$0xff] %vm22, %v330
  // Predicated region
  $region14: #{tpu_custom_call.1} parent=0 // pred_check
    _
  $region15: #{tpu_custom_call.1} parent=0 // pred_check_branch
    %340 = sbr.rel (0) target = $region17
  $region16: #{tpu_custom_call.1} parent=0 // pred_region
    _
  $region17: #{tpu_custom_call.1} parent=0 // pred_fallthru
    _
  // Predicated region
  $region18: #{tpu_custom_call.1} parent=0 // pred_check
    _
  $region19: #{tpu_custom_call.1} parent=0 // pred_check_branch
    %342 = sbr.rel (0) target = $region21
  $region20: #{tpu_custom_call.1} parent=0 // pred_region
    _
  $region21: #{tpu_custom_call.1} parent=0 // pred_fallthru
    _

</llo_original>
